<compile_context>
chip_gen: v5e
topology: v5e:2x2
jax: 0.10.0
libtpu: 0.0.40
codegen_flags: <defaults>
</compile_context>

<pallas_src>
import functools

import jax
import jax.numpy as jnp
from jax import lax
from jax.experimental import pallas as pl
from jax.experimental.pallas import tpu as pltpu


def _stats_kernel(x_ref, xsum_ref, g_ref):
    # x_ref: (1, T, Cin) bf16 ; xsum_ref: (1, 1, Cin) f32 ; g_ref: (1, Cin, Cin) f32
    xt = x_ref[0]                                                   # (T, Cin) bf16
    # Gram matrix x^T x on the MXU (contract the big T axis; M=N=Cin are small).
    g = lax.dot_general(xt, xt, (((0,), (0,)), ((), ())),
                        preferred_element_type=jnp.float32)        # (Cin, Cin)
    s = jnp.sum(xt.astype(jnp.float32), axis=0, keepdims=True)     # (1, Cin)

    @pl.when(pl.program_id(1) == 0)
    def _():
        xsum_ref[0] = s
        g_ref[0] = g

    @pl.when(pl.program_id(1) != 0)
    def _():
        xsum_ref[0] += s
        g_ref[0] += g


def _conv_norm_kernel(x_ref, w_ref, scale_ref, shift_ref, o_ref, *, relu):
    # x_ref: (1, T, Cin) bf16 ; w_ref: (Cin, uu*Cout) bf16
    # scale/shift: (1, 1, uu*Cout) f32 ; o_ref: (1, T, uu*Cout) f32
    y = jnp.dot(x_ref[0], w_ref[...], preferred_element_type=jnp.float32)  # one wide MXU push
    out = y * scale_ref[0] + shift_ref[0]                                  # folded IN affine
    if relu:
        out = jnp.maximum(out, 0.0)
    o_ref[0] = out


def _pick_tile(HW, per_row_bytes, budget_bytes):
    """Largest divisor-of-HW tile (multiple of 8) whose double-buffered blocks fit budget."""
    for t in (4096, 2048, 1024, 512, 256, 128, 64, 32, 16, 8):
        if HW % t == 0 and per_row_bytes * t <= budget_bytes:
            return t
    return HW   # fall back to full extent (always a legal block: equals the array dim)


def basic_tr_conv(x_nchw, weight, gamma, beta, *, upsample, relu, eps=1e-5, hw_tile=None):
    """x_nchw: [N, Cin, H, W]; weight: [Cin, Cout, u, u] (PyTorch ConvTranspose2d layout);
    gamma/beta: [Cout]. Returns [N, Cout, H*u, W*u] float32 (NCHW, PyTorch-compatible)."""
    N, Cin, H, W = x_nchw.shape
    w_cin, Cout, u, u2 = weight.shape
    assert u == upsample and u2 == upsample and w_cin == Cin
    uu = u * u
    HW = H * W
    uuC = uu * Cout

    # ---- layout plumbing: matmul-wide, lane-dense, bf16 MXU operands ------------------------
    x_k = jnp.transpose(x_nchw, (0, 2, 3, 1)).reshape(N, HW, Cin).astype(jnp.bfloat16)
    # weight [Cin, Cout, u, u] -> [Cin, (dh*u+dw)*Cout + co] : one fused [Cin, uu*Cout] matrix.
    w_k = jnp.transpose(weight, (0, 2, 3, 1)).reshape(Cin, uuC).astype(jnp.bfloat16)

    budget = 6 << 20
    if hw_tile is None:
        t_stats = _pick_tile(HW, 2 * Cin * 2, budget)                       # x only (bf16 x2 bufs)
        t_conv = _pick_tile(HW, 2 * Cin * 2 + 2 * uuC * 4, budget)          # + f32 out (x2 bufs)
    else:
        assert HW % hw_tile == 0
        t_stats = t_conv = hw_tile
    n_stats = HW // t_stats
    n_conv = HW // t_conv

    # ---- pass 1: stream x, accumulate sum(x) and G = x^T x per image ------------------------
    xsum, gram = pl.pallas_call(
        _stats_kernel,
        out_shape=(
            jax.ShapeDtypeStruct((N, 1, Cin), jnp.float32),
            jax.ShapeDtypeStruct((N, Cin, Cin), jnp.float32),
        ),
        grid_spec=pltpu.PrefetchScalarGridSpec(
            num_scalar_prefetch=0,
            grid=(N, n_stats),
            in_specs=[pl.BlockSpec((1, t_stats, Cin), lambda n, t: (n, t, 0))],
            out_specs=(
                pl.BlockSpec((1, 1, Cin), lambda n, t: (n, 0, 0)),       # resident accumulator
                pl.BlockSpec((1, Cin, Cin), lambda n, t: (n, 0, 0)),     # resident accumulator
            ),
        ),
        compiler_params=pltpu.CompilerParams(
            dimension_semantics=("parallel", "arbitrary")),
    )(x_k)

    # ---- finalize stats: tiny O(N*Cin^2*uuC) work, fold affine into scale/shift -------------
    Wf = w_k.astype(jnp.float32)                                   # bf16-rounded weights, f32
    s_col = xsum[:, 0, :] @ Wf                                     # (N, uuC)  sum_hw y
    gw = jnp.einsum('nij,jc->nic', gram, Wf)                       # (N, Cin, uuC)
    ss_col = jnp.sum(gw * Wf[None], axis=1)                        # (N, uuC)  sum_hw y^2
    s_c = s_col.reshape(N, uu, Cout).sum(axis=1)                   # (N, Cout)
    ss_c = ss_col.reshape(N, uu, Cout).sum(axis=1)
    count = jnp.float32(uu * HW)
    mean = s_c / count
    var = jnp.maximum(ss_c / count - mean * mean, 0.0)             # biased var (PyTorch IN)
    inv = lax.rsqrt(var + eps)
    scale_c = inv * gamma[None, :].astype(jnp.float32)             # (N, Cout)
    shift_c = beta[None, :].astype(jnp.float32) - mean * scale_c
    scale = jnp.tile(scale_c, (1, uu)).reshape(N, 1, uuC)          # lane layout matches conv out
    shift = jnp.tile(shift_c, (1, uu)).reshape(N, 1, uuC)

    # ---- pass 2: conv matmul + streamed normalize (+ReLU), lane-dense output ----------------
    out_k = pl.pallas_call(
        functools.partial(_conv_norm_kernel, relu=relu),
        out_shape=jax.ShapeDtypeStruct((N, HW, uuC), jnp.float32),
        grid_spec=pltpu.PrefetchScalarGridSpec(
            num_scalar_prefetch=0,
            grid=(N, n_conv),
            in_specs=[
                pl.BlockSpec((1, t_conv, Cin), lambda n, t: (n, t, 0)),
                pl.BlockSpec((Cin, uuC), lambda n, t: (0, 0)),
                pl.BlockSpec((1, 1, uuC), lambda n, t: (n, 0, 0)),
                pl.BlockSpec((1, 1, uuC), lambda n, t: (n, 0, 0)),
            ],
            out_specs=pl.BlockSpec((1, t_conv, uuC), lambda n, t: (n, t, 0)),
        ),
        compiler_params=pltpu.CompilerParams(
            dimension_semantics=("parallel", "parallel")),
    )(x_k, w_k, scale, shift)

    # ---- layout plumbing back to NCHW (PyTorch semantics). NHWC consumers can take
    #      out_k.reshape(N, H, W, u, u, Cout) directly and skip this HBM pass. ----------------
    out = out_k.reshape(N, H, W, u, u, Cout)
    out = jnp.transpose(out, (0, 5, 1, 3, 2, 4))                   # (n, co, h, dh, w, dw)
    return out.reshape(N, Cout, H * u, W * u)


def _reference(x, weight, gamma, beta, *, upsample, relu, eps=1e-5):
    u = upsample
    y = jnp.einsum("nihw,iopq->nohpwq", x, weight)                 # [N, Cout, H, u, W, u]
    N, Cout, H, _, W, _ = y.shape
    y = y.reshape(N, Cout, H * u, W * u)
    mean = y.mean(axis=(2, 3), keepdims=True)
    var = ((y - mean) ** 2).mean(axis=(2, 3), keepdims=True)
    yn = (y - mean) / jnp.sqrt(var + eps)
    yn = yn * gamma[None, :, None, None] + beta[None, :, None, None]
    if relu:
        yn = jnp.maximum(yn, 0.0)
    return yn


if __name__ == "__main__":
    # Small shapes consistent with the module.
    N, Cin, H, W = 2, 4, 16, 16
    Cout, upsample, relu = 8, 2, True

    key = jax.random.PRNGKey(0)
    kx, kw, kg, kb = jax.random.split(key, 4)
    x = jax.random.normal(kx, (N, Cin, H, W), dtype=jnp.float32)
    # ConvTranspose2d weight: [in_ch, out_ch, kH, kW]
    weight = jax.random.normal(kw, (Cin, Cout, upsample, upsample), dtype=jnp.float32) * 0.2
    # InstanceNorm2d affine params
    gamma = 1.0 + 0.1 * jax.random.normal(kg, (Cout,), dtype=jnp.float32)
    beta = 0.1 * jax.random.normal(kb, (Cout,), dtype=jnp.float32)

    # hw_tile=64 forces 4 HW tiles so the streamed-stats accumulation path is exercised.
    fwd = jax.jit(functools.partial(basic_tr_conv, upsample=upsample, relu=relu, hw_tile=64))
    out = jax.block_until_ready(fwd(x, weight, gamma, beta))

    # Reference with the same bf16-cast matmul operands the kernel feeds the MXU.
    xb = x.astype(jnp.bfloat16).astype(jnp.float32)
    wb = weight.astype(jnp.bfloat16).astype(jnp.float32)
    ref = _reference(xb, wb, gamma, beta, upsample=upsample, relu=relu)

    assert out.shape == (N, Cout, H * upsample, W * upsample)
    assert jnp.allclose(out, ref, rtol=1e-3, atol=1e-3), "mismatch vs reference"
    print("KERNEL_OK")
</pallas_src>

<mosaic_0001>
module attributes {stable_mosaic.version = 11 : i64} {
  func.func @_stats_kernel(%arg0: i32, %arg1: i32, %arg2: memref<1x64x4xbf16, #tpu.memory_space<vmem>>, %arg3: memref<1x1x4xf32, #tpu.memory_space<vmem>>, %arg4: memref<1x4x4xf32, #tpu.memory_space<vmem>>) attributes {dimension_semantics = [#tpu.dimension_semantics<parallel>, #tpu.dimension_semantics<arbitrary>], iteration_bounds = array<i64: 2, 4>, scalar_prefetch = 0 : i64, scratch_operands = 0 : i64, tpu.core_type = #tpu.core_type<tc>, window_params = [{transform_indices = @transform_0, window_bounds = array<i64: 1, 64, 4>}, {transform_indices = @transform_1, window_bounds = array<i64: 1, 1, 4>}, {transform_indices = @transform_2, window_bounds = array<i64: 1, 4, 4>}]} {
    %c0 = arith.constant 0 : index
    %c0_0 = arith.constant 0 : index
    %c0_1 = arith.constant 0 : index
    %0 = vector.load %arg2[%c0, %c0_0, %c0_1] : memref<1x64x4xbf16, #tpu.memory_space<vmem>>, vector<1x64x4xbf16>
    %1 = vector.shape_cast %0 : vector<1x64x4xbf16> to vector<64x4xbf16>
    %cst = arith.constant dense<0.000000e+00> : vector<4x4xf32>
    %2 = tpu.matmul %1, %1, %cst {dimension_numbers = #tpu.dot_dimension_numbers<[0], [0], [1], [1], [0, 1, 1, 1], [], []>} : vector<64x4xbf16>, vector<64x4xbf16>, vector<4x4xf32> -> vector<4x4xf32>
    %3 = arith.extf %1 : vector<64x4xbf16> to vector<64x4xf32>
    %cst_2 = arith.constant dense<0.000000e+00> : vector<4xf32>
    %4 = vector.multi_reduction <add>, %3, %cst_2 [0] : vector<64x4xf32> to vector<4xf32>
    %5 = vector.shape_cast %4 : vector<4xf32> to vector<1x4xf32>
    %c0_i32 = arith.constant 0 : i32
    %6 = arith.cmpi eq, %arg1, %c0_i32 : i32
    %7 = arith.extui %6 : i1 to i32
    %c0_i32_3 = arith.constant 0 : i32
    %8 = arith.cmpi ne, %7, %c0_i32_3 : i32
    scf.if %8 {
      %c0_6 = arith.constant 0 : index
      %c0_7 = arith.constant 0 : index
      %c0_8 = arith.constant 0 : index
      %12 = vector.load %arg3[%c0_6, %c0_7, %c0_8] : memref<1x1x4xf32, #tpu.memory_space<vmem>>, vector<1x1x4xf32>
      %13 = vector.shape_cast %12 : vector<1x1x4xf32> to vector<1x4xf32>
      %14 = vector.shape_cast %5 : vector<1x4xf32> to vector<1x1x4xf32>
      tpu.vector_store %arg3[%c0_6, %c0_7, %c0_8], %14 {strides = array<i32>} : memref<1x1x4xf32, #tpu.memory_space<vmem>>, vector<1x1x4xf32>,
      %c0_9 = arith.constant 0 : index
      %c0_10 = arith.constant 0 : index
      %c0_11 = arith.constant 0 : index
      %15 = vector.load %arg4[%c0_9, %c0_10, %c0_11] : memref<1x4x4xf32, #tpu.memory_space<vmem>>, vector<1x4x4xf32>
      %16 = vector.shape_cast %15 : vector<1x4x4xf32> to vector<4x4xf32>
      %17 = vector.shape_cast %2 : vector<4x4xf32> to vector<1x4x4xf32>
      tpu.vector_store %arg4[%c0_9, %c0_10, %c0_11], %17 {strides = array<i32>} : memref<1x4x4xf32, #tpu.memory_space<vmem>>, vector<1x4x4xf32>,
    } else {
    }
    %c0_i32_4 = arith.constant 0 : i32
    %9 = arith.cmpi ne, %arg1, %c0_i32_4 : i32
    %10 = arith.extui %9 : i1 to i32
    %c0_i32_5 = arith.constant 0 : i32
    %11 = arith.cmpi ne, %10, %c0_i32_5 : i32
    scf.if %11 {
      %c0_6 = arith.constant 0 : index
      %c0_7 = arith.constant 0 : index
      %c0_8 = arith.constant 0 : index
      %12 = vector.load %arg3[%c0_6, %c0_7, %c0_8] : memref<1x1x4xf32, #tpu.memory_space<vmem>>, vector<1x1x4xf32>
      %13 = vector.shape_cast %12 : vector<1x1x4xf32> to vector<1x4xf32>
      %14 = arith.addf %13, %5 : vector<1x4xf32>
      %c0_9 = arith.constant 0 : index
      %c0_10 = arith.constant 0 : index
      %c0_11 = arith.constant 0 : index
      %15 = vector.load %arg3[%c0_9, %c0_10, %c0_11] : memref<1x1x4xf32, #tpu.memory_space<vmem>>, vector<1x1x4xf32>
      %16 = vector.shape_cast %15 : vector<1x1x4xf32> to vector<1x4xf32>
      %17 = vector.shape_cast %14 : vector<1x4xf32> to vector<1x1x4xf32>
      tpu.vector_store %arg3[%c0_9, %c0_10, %c0_11], %17 {strides = array<i32>} : memref<1x1x4xf32, #tpu.memory_space<vmem>>, vector<1x1x4xf32>,
      %c0_12 = arith.constant 0 : index
      %c0_13 = arith.constant 0 : index
      %c0_14 = arith.constant 0 : index
      %18 = vector.load %arg4[%c0_12, %c0_13, %c0_14] : memref<1x4x4xf32, #tpu.memory_space<vmem>>, vector<1x4x4xf32>
      %19 = vector.shape_cast %18 : vector<1x4x4xf32> to vector<4x4xf32>
      %20 = arith.addf %19, %2 : vector<4x4xf32>
      %c0_15 = arith.constant 0 : index
      %c0_16 = arith.constant 0 : index
      %c0_17 = arith.constant 0 : index
      %21 = vector.load %arg4[%c0_15, %c0_16, %c0_17] : memref<1x4x4xf32, #tpu.memory_space<vmem>>, vector<1x4x4xf32>
      %22 = vector.shape_cast %21 : vector<1x4x4xf32> to vector<4x4xf32>
      %23 = vector.shape_cast %20 : vector<4x4xf32> to vector<1x4x4xf32>
      tpu.vector_store %arg4[%c0_15, %c0_16, %c0_17], %23 {strides = array<i32>} : memref<1x4x4xf32, #tpu.memory_space<vmem>>, vector<1x4x4xf32>,
    } else {
    }
    return
  }
  func.func @transform_0(%arg0: i32, %arg1: i32) -> (i32, i32, i32) {
    %c0_i32 = arith.constant 0 : i32
    %c0_i32_0 = arith.constant 0 : i32
    return %arg0, %arg1, %c0_i32 : i32, i32, i32
  }
  func.func @transform_1(%arg0: i32, %arg1: i32) -> (i32, i32, i32) {
    %c0_i32 = arith.constant 0 : i32
    %c0_i32_0 = arith.constant 0 : i32
    %c0_i32_1 = arith.constant 0 : i32
    return %arg0, %c0_i32, %c0_i32_0 : i32, i32, i32
  }
  func.func @transform_2(%arg0: i32, %arg1: i32) -> (i32, i32, i32) {
    %c0_i32 = arith.constant 0 : i32
    %c0_i32_0 = arith.constant 0 : i32
    %c0_i32_1 = arith.constant 0 : i32
    return %arg0, %c0_i32, %c0_i32_0 : i32, i32, i32
  }
}

module attributes {stable_mosaic.version = 11 : i64} {
  func.func @_conv_norm_kernel(%arg0: i32, %arg1: i32, %arg2: memref<1x64x4xbf16, #tpu.memory_space<vmem>>, %arg3: memref<4x32xbf16, #tpu.memory_space<vmem>>, %arg4: memref<1x1x32xf32, #tpu.memory_space<vmem>>, %arg5: memref<1x1x32xf32, #tpu.memory_space<vmem>>, %arg6: memref<1x64x32xf32, #tpu.memory_space<vmem>>) attributes {dimension_semantics = [#tpu.dimension_semantics<parallel>, #tpu.dimension_semantics<parallel>], iteration_bounds = array<i64: 2, 4>, scalar_prefetch = 0 : i64, scratch_operands = 0 : i64, tpu.core_type = #tpu.core_type<tc>, window_params = [{transform_indices = @transform_0, window_bounds = array<i64: 1, 64, 4>}, {pipeline_mode = #tpu.pipeline_mode<synchronous>, transform_indices = @transform_1, window_bounds = array<i64: 4, 32>}, {transform_indices = @transform_2, window_bounds = array<i64: 1, 1, 32>}, {transform_indices = @transform_3, window_bounds = array<i64: 1, 1, 32>}, {transform_indices = @transform_4, window_bounds = array<i64: 1, 64, 32>}]} {
    %c0 = arith.constant 0 : index
    %c0_0 = arith.constant 0 : index
    %c0_1 = arith.constant 0 : index
    %0 = vector.load %arg2[%c0, %c0_0, %c0_1] : memref<1x64x4xbf16, #tpu.memory_space<vmem>>, vector<1x64x4xbf16>
    %1 = vector.shape_cast %0 : vector<1x64x4xbf16> to vector<64x4xbf16>
    %c0_2 = arith.constant 0 : index
    %c0_3 = arith.constant 0 : index
    %2 = vector.load %arg3[%c0_2, %c0_3] : memref<4x32xbf16, #tpu.memory_space<vmem>>, vector<4x32xbf16>
    %cst = arith.constant dense<0.000000e+00> : vector<64x32xf32>
    %3 = tpu.matmul %1, %2, %cst {dimension_numbers = #tpu.dot_dimension_numbers<[1], [0], [0], [1], [0, 0, 1, 1], [], []>} : vector<64x4xbf16>, vector<4x32xbf16>, vector<64x32xf32> -> vector<64x32xf32>
    %c0_4 = arith.constant 0 : index
    %c0_5 = arith.constant 0 : index
    %c0_6 = arith.constant 0 : index
    %4 = vector.load %arg4[%c0_4, %c0_5, %c0_6] : memref<1x1x32xf32, #tpu.memory_space<vmem>>, vector<1x1x32xf32>
    %5 = vector.shape_cast %4 : vector<1x1x32xf32> to vector<1x32xf32>
    %6 = vector.broadcast %5 : vector<1x32xf32> to vector<64x32xf32>
    %7 = arith.mulf %3, %6 : vector<64x32xf32>
    %c0_7 = arith.constant 0 : index
    %c0_8 = arith.constant 0 : index
    %c0_9 = arith.constant 0 : index
    %8 = vector.load %arg5[%c0_7, %c0_8, %c0_9] : memref<1x1x32xf32, #tpu.memory_space<vmem>>, vector<1x1x32xf32>
    %9 = vector.shape_cast %8 : vector<1x1x32xf32> to vector<1x32xf32>
    %10 = vector.broadcast %9 : vector<1x32xf32> to vector<64x32xf32>
    %11 = arith.addf %7, %10 : vector<64x32xf32>
    %cst_10 = arith.constant 0.000000e+00 : f32
    %12 = vector.broadcast %cst_10 : f32 to vector<64x32xf32>
    %13 = arith.maximumf %11, %12 : vector<64x32xf32>
    %c0_11 = arith.constant 0 : index
    %c0_12 = arith.constant 0 : index
    %c0_13 = arith.constant 0 : index
    %14 = vector.load %arg6[%c0_11, %c0_12, %c0_13] : memref<1x64x32xf32, #tpu.memory_space<vmem>>, vector<1x64x32xf32>
    %15 = vector.shape_cast %14 : vector<1x64x32xf32> to vector<64x32xf32>
    %16 = vector.shape_cast %13 : vector<64x32xf32> to vector<1x64x32xf32>
    tpu.vector_store %arg6[%c0_11, %c0_12, %c0_13], %16 {strides = array<i32>} : memref<1x64x32xf32, #tpu.memory_space<vmem>>, vector<1x64x32xf32>,
    return
  }
  func.func @transform_0(%arg0: i32, %arg1: i32) -> (i32, i32, i32) {
    %c0_i32 = arith.constant 0 : i32
    %c0_i32_0 = arith.constant 0 : i32
    return %arg0, %arg1, %c0_i32 : i32, i32, i32
  }
  func.func @transform_1(%arg0: i32, %arg1: i32) -> (i32, i32) {
    %c0_i32 = arith.constant 0 : i32
    %c0_i32_0 = arith.constant 0 : i32
    %c0_i32_1 = arith.constant 0 : i32
    return %c0_i32, %c0_i32_0 : i32, i32
  }
  func.func @transform_2(%arg0: i32, %arg1: i32) -> (i32, i32, i32) {
    %c0_i32 = arith.constant 0 : i32
    %c0_i32_0 = arith.constant 0 : i32
    %c0_i32_1 = arith.constant 0 : i32
    return %arg0, %c0_i32, %c0_i32_0 : i32, i32, i32
  }
  func.func @transform_3(%arg0: i32, %arg1: i32) -> (i32, i32, i32) {
    %c0_i32 = arith.constant 0 : i32
    %c0_i32_0 = arith.constant 0 : i32
    %c0_i32_1 = arith.constant 0 : i32
    return %arg0, %c0_i32, %c0_i32_0 : i32, i32, i32
  }
  func.func @transform_4(%arg0: i32, %arg1: i32) -> (i32, i32, i32) {
    %c0_i32 = arith.constant 0 : i32
    %c0_i32_0 = arith.constant 0 : i32
    return %arg0, %arg1, %c0_i32 : i32, i32, i32
  }
}

</mosaic_0001>

<llo_original>
// kernel: basic_tr_conv.3
$region0: #{basic_tr_conv.3}
  #allocation0 [shape = 'u32[]', space=smem, size = 0x4, offset = 0x4, fixed_abs, tag = 'smem constant byte address 0x4 - core index']
  #allocation1 [shape = 'u32[72,128]{1,0:T(1,128)}', space=vmem, size = 0x9000, scoped, tag = 'internal scratch']
  %s0 = inlined_call_operand.vmem [shape: bf16[2,256,4], index: 0, kind: input, shape index: {}]
  %s1 = inlined_call_operand.vmem [shape: bf16[4,32], index: 1, kind: input, shape index: {}]
  %s2 = inlined_call_operand.vmem [shape: f32[2,1,32], index: 2, kind: input, shape index: {}]
  %s3 = inlined_call_operand.vmem [shape: f32[2,1,32], index: 3, kind: input, shape index: {}]
  %s4 = inlined_call_operand.vmem [shape: f32[2,256,32], index: 4, kind: output, shape index: {}]
  %s5 = sld [smem:[#allocation0]]
  $region49: #{basic_tr_conv.3} parent=0
    _
  %s7 = ssub.s32 1, %s5
  %s8 = scalar_select 0, %s7, %s5
  loop: start=0, step=1, limit=10
  $region2: #{basic_tr_conv.3} parent=0 // loop_pre_header
    _
  $region3: #{basic_tr_conv.3} parent=0 // loop_header
    %s10 = sphi 0, %s14
    %p11 = scmp.ge.s32.totalorder %s10, 10
    %s17 = sphi 0, %s29
    %s18 = sphi 0, %s25
    %s19 = sphi 0, %s17
    %s20 = sphi 0, %s18
    %s21 = sphi 0, %s19
    %s22 = sphi 0, %s20
    %s34 = sphi 0, %s36
    %s37 = sphi 0, %s34
    %s38 = sphi 0, %s37
    %s54 = sphi 0, %s38
    %s58 = sphi 0, %s58
    %s60 = sphi 0, %s58
    %s61 = sphi 0, %s60
    %s75 = sphi 0, %s61
    %s81 = sphi 0, %s83
    %s84 = sphi 0, %s81
    %s85 = sphi 0, %s84
    %s101 = sphi 0, %s85
    %s107 = sphi 0, %s109
    %s110 = sphi 0, %s107
    %s111 = sphi 0, %s110
    %s127 = sphi 0, %s111
    %s135 = sphi 0, %s137
    %s138 = sphi 0, %s135
    %s139 = sphi 0, %s138
    %s155 = sphi 0, %s139
  $region4: #{basic_tr_conv.3} parent=0 // loop_header_branch
    %13 = sbr.rel (%p11) target = $region8
  $region5: #{basic_tr_conv.3} parent=0 // loop_body
    %s15 = ssub.s32 %s10, 1
    %s16 = ssub.s32 %s10, 2
    %s23 = sadd.s32 1, %s18
    %p24 = scmp.ge.s32.totalorder %s23, 4
    %s25 = scalar_select %p24, 0, %s23
    %s26 = sadd.s32 1, %s17
    %s27 = scalar_select %p24, %s26, %s17
    %p28 = scmp.ge.s32.totalorder %s27, 2
    %s29 = scalar_select %p28, 0, %s27
    %s30 = ssub.s32 %s17, %s29
    %s31 = ssub.s32 %s18, %s25
    %s32 = sor.u32 %s30, %s31
    %p33 = scmp.eq.s32.totalorder %s32, 0
    %s35 = sadd.s32 %s34, 1
    %s36 = scalar_select %p33, %s34, %s35
    %p39 = pneg %p33
    %p40 = scmp.eq.s32.totalorder %s10, 7
    %p41 = por %p39, %p40
    %p42 = scmp.ne.s32.totalorder %s34, %s37
    %p43 = scmp.eq.s32.totalorder %s10, 0
    %p44 = por %p42, %p43
    %p45 = scmp.ne.s32.totalorder %s34, %s37
    %p46 = scmp.eq.s32.totalorder %s15, 7
    %p47 = por %p45, %p46
    %p48 = scmp.ne.s32.totalorder %s37, %s38
    %p49 = scmp.eq.s32.totalorder %s15, 0
    %p50 = por %p48, %p49
    %p51 = scmp.ne.s32.totalorder %s37, %s38
    %p52 = scmp.eq.s32.totalorder %s16, 7
    %p53 = por %p51, %p52
    %p55 = scmp.ne.s32.totalorder %s38, %s54
    %p56 = scmp.eq.s32.totalorder %s16, 0
    %p57 = por %p55, %p56
    %s59 = sadd.s32 %s58, 1
    %p62 = scmp.eq.s32.totalorder %s10, 7
    %p63 = scmp.ne.s32.totalorder %s58, %s60
    %p64 = scmp.eq.s32.totalorder %s10, 0
    %p65 = por %p63, %p64
    %p66 = scmp.ne.s32.totalorder %s58, %s60
    %p67 = scmp.eq.s32.totalorder %s15, 7
    %p68 = por %p66, %p67
    %p69 = scmp.ne.s32.totalorder %s60, %s61
    %p70 = scmp.eq.s32.totalorder %s15, 0
    %p71 = por %p69, %p70
    %p72 = scmp.ne.s32.totalorder %s60, %s61
    %p73 = scmp.eq.s32.totalorder %s16, 7
    %p74 = por %p72, %p73
    %p76 = scmp.ne.s32.totalorder %s61, %s75
    %p77 = scmp.eq.s32.totalorder %s16, 0
    %p78 = por %p76, %p77
    %s79 = ssub.s32 %s17, %s29
    %p80 = scmp.eq.s32.totalorder %s79, 0
    %s82 = sadd.s32 %s81, 1
    %s83 = scalar_select %p80, %s81, %s82
    %p86 = pneg %p80
    %p87 = scmp.eq.s32.totalorder %s10, 7
    %p88 = por %p86, %p87
    %p89 = scmp.ne.s32.totalorder %s81, %s84
    %p90 = scmp.eq.s32.totalorder %s10, 0
    %p91 = por %p89, %p90
    %p92 = scmp.ne.s32.totalorder %s81, %s84
    %p93 = scmp.eq.s32.totalorder %s15, 7
    %p94 = por %p92, %p93
    %p95 = scmp.ne.s32.totalorder %s84, %s85
    %p96 = scmp.eq.s32.totalorder %s15, 0
    %p97 = por %p95, %p96
    %p98 = scmp.ne.s32.totalorder %s84, %s85
    %p99 = scmp.eq.s32.totalorder %s16, 7
    %p100 = por %p98, %p99
    %p102 = scmp.ne.s32.totalorder %s85, %s101
    %p103 = scmp.eq.s32.totalorder %s16, 0
    %p104 = por %p102, %p103
    %s105 = ssub.s32 %s17, %s29
    %p106 = scmp.eq.s32.totalorder %s105, 0
    %s108 = sadd.s32 %s107, 1
    %s109 = scalar_select %p106, %s107, %s108
    %p112 = pneg %p106
    %p113 = scmp.eq.s32.totalorder %s10, 7
    %p114 = por %p112, %p113
    %p115 = scmp.ne.s32.totalorder %s107, %s110
    %p116 = scmp.eq.s32.totalorder %s10, 0
    %p117 = por %p115, %p116
    %p118 = scmp.ne.s32.totalorder %s107, %s110
    %p119 = scmp.eq.s32.totalorder %s15, 7
    %p120 = por %p118, %p119
    %p121 = scmp.ne.s32.totalorder %s110, %s111
    %p122 = scmp.eq.s32.totalorder %s15, 0
    %p123 = por %p121, %p122
    %p124 = scmp.ne.s32.totalorder %s110, %s111
    %p125 = scmp.eq.s32.totalorder %s16, 7
    %p126 = por %p124, %p125
    %p128 = scmp.ne.s32.totalorder %s111, %s127
    %p129 = scmp.eq.s32.totalorder %s16, 0
    %p130 = por %p128, %p129
    %s131 = ssub.s32 %s17, %s29
    %s132 = ssub.s32 %s18, %s25
    %s133 = sor.u32 %s131, %s132
    %p134 = scmp.eq.s32.totalorder %s133, 0
    %s136 = sadd.s32 %s135, 1
    %s137 = scalar_select %p134, %s135, %s136
    %p140 = pneg %p134
    %p141 = scmp.eq.s32.totalorder %s10, 7
    %p142 = por %p140, %p141
    %p143 = scmp.ne.s32.totalorder %s135, %s138
    %p144 = scmp.eq.s32.totalorder %s10, 0
    %p145 = por %p143, %p144
    %p146 = scmp.ne.s32.totalorder %s135, %s138
    %p147 = scmp.eq.s32.totalorder %s15, 7
    %p148 = por %p146, %p147
    %p149 = scmp.ne.s32.totalorder %s138, %s139
    %p150 = scmp.eq.s32.totalorder %s15, 0
    %p151 = por %p149, %p150
    %p152 = scmp.ne.s32.totalorder %s138, %s139
    %p153 = scmp.eq.s32.totalorder %s16, 7
    %p154 = por %p152, %p153
    %p156 = scmp.ne.s32.totalorder %s139, %s155
    %p157 = scmp.eq.s32.totalorder %s16, 0
    %p158 = por %p156, %p157
    %p159 = scmp.le.s32.totalorder 1, %s10
    %p160 = scmp.lt.s32.totalorder %s10, 9
    %p161 = pnand %p159, %p160
    %p162 = pneg %p161
    // Predicated region
    $region9: #{basic_tr_conv.3} parent=5 // pred_check
      _
    $region10: #{basic_tr_conv.3} parent=5 // pred_check_branch
      %164 = sbr.rel (%p161) target = $region12
    $region11: #{basic_tr_conv.3} parent=5 // pred_region
      %s165 = ssub.s32 %s10, 1
      // Predicated region
      $region13: #{basic_tr_conv.3} parent=11 // pred_check
        %p166 = pneg %p71
      $region14: #{basic_tr_conv.3} parent=11 // pred_check_branch
        %168 = sbr.rel (%p166) target = $region16
      $region15: #{basic_tr_conv.3} parent=11 // pred_region
        _
      $region16: #{basic_tr_conv.3} parent=11 // pred_fallthru
        _
    $region12: #{basic_tr_conv.3} parent=5 // pred_fallthru
      _
    %p169 = scmp.lt.s32.totalorder %s10, 8
    // Predicated region
    $region17: #{basic_tr_conv.3} parent=5 // pred_check
      %p170 = pneg %p169
    $region18: #{basic_tr_conv.3} parent=5 // pred_check_branch
      %172 = sbr.rel (%p170) target = $region20
    $region19: #{basic_tr_conv.3} parent=5 // pred_region
      // Predicated region
      $region21: #{basic_tr_conv.3} parent=19 // pred_check
        %p173 = pneg %p44
      $region22: #{basic_tr_conv.3} parent=19 // pred_check_branch
        %175 = sbr.rel (%p173) target = $region24
      $region23: #{basic_tr_conv.3} parent=19 // pred_region
        %s176 = smul.u32 8, %s18
        %p177 = scmp.lt.s32.totalorder %s17, 1
        %s178 = scalar_select %p177, %s17, 1
        %p179 = scmp.lt.s32.totalorder %s176, 31
        %s180 = scalar_select %p179, %s176, 31
        %s181 = smul.addr %s178, 32
        %s182 = sadd.s32 %s180, %s181
        %s183 = smul.addr %s182, 4
        %s184 = scalar_lea.vmem %s0, %s183
        %s185 = smul.u32 8, %s18
      $region24: #{basic_tr_conv.3} parent=19 // pred_fallthru
        _
      // Predicated region
      $region25: #{basic_tr_conv.3} parent=19 // pred_check
        %p186 = pneg %p91
      $region26: #{basic_tr_conv.3} parent=19 // pred_check_branch
        %188 = sbr.rel (%p186) target = $region28
      $region27: #{basic_tr_conv.3} parent=19 // pred_region
        %p189 = scmp.lt.s32.totalorder %s17, 1
        %s190 = scalar_select %p189, %s17, 1
        %s191 = scalar_lea.vmem %s2, %s190
      $region28: #{basic_tr_conv.3} parent=19 // pred_fallthru
        _
      // Predicated region
      $region29: #{basic_tr_conv.3} parent=19 // pred_check
        %p192 = pneg %p117
      $region30: #{basic_tr_conv.3} parent=19 // pred_check_branch
        %194 = sbr.rel (%p192) target = $region32
      $region31: #{basic_tr_conv.3} parent=19 // pred_region
        %p195 = scmp.lt.s32.totalorder %s17, 1
        %s196 = scalar_select %p195, %s17, 1
        %s197 = scalar_lea.vmem %s3, %s196
      $region32: #{basic_tr_conv.3} parent=19 // pred_fallthru
        _
    $region20: #{basic_tr_conv.3} parent=5 // pred_fallthru
      _
    %p198 = scmp.le.s32.totalorder 1, %s10
    %p199 = scmp.lt.s32.totalorder %s10, 9
    %p200 = pnand %p198, %p199
    %p201 = pneg %p200
    // Predicated region
    $region33: #{basic_tr_conv.3} parent=5 // pred_check
      _
    $region34: #{basic_tr_conv.3} parent=5 // pred_check_branch
      %203 = sbr.rel (%p200) target = $region36
    $region35: #{basic_tr_conv.3} parent=5 // pred_region
      %s204 = ssub.s32 %s10, 1
      %s205 = smul.u32 8, %s20
      %p206 = scmp.lt.s32.totalorder %s19, 1
      %s207 = scalar_select %p206, %s19, 1
      %p208 = scmp.lt.s32.totalorder %s205, 31
      %s209 = scalar_select %p208, %s205, 31
      %s210 = smul.addr %s207, 32
      %s211 = sadd.s32 %s209, %s210
      %s212 = smul.addr %s211, 4
      %s213 = scalar_lea.vmem %s0, %s212
      %p214 = pneg %p50
      %p215 = pneg %p47
      %p216 = pneg %p71
      %p217 = pneg %p68
      %p218 = scmp.lt.s32.totalorder %s19, 1
      %s219 = scalar_select %p218, %s19, 1
      %s220 = scalar_lea.vmem %s2, %s219
      %p221 = pneg %p97
      %p222 = pneg %p94
      %p223 = scmp.lt.s32.totalorder %s19, 1
      %s224 = scalar_select %p223, %s19, 1
      %s225 = scalar_lea.vmem %s3, %s224
      %p226 = pneg %p123
      %p227 = pneg %p120
      %p228 = pneg %p151
      %p229 = pneg %p148
      %s230 = smul.u32 8, %s20
      %p231 = scmp.lt.s32.totalorder %s19, 1
      %s232 = scalar_select %p231, %s19, 1
      %p233 = scmp.lt.s32.totalorder %s230, 31
      %s234 = scalar_select %p233, %s230, 31
      %s235 = smul.addr %s232, 32
      %s236 = sadd.s32 %s234, %s235
      %s237 = smul.addr %s236, 8
      %s238 = scalar_lea.vmem %s4, %s237
      %s239 = smul.u32 8, %s20
      %p240 = scmp.lt.s32.totalorder %s19, 1
      %s241 = scalar_select %p240, %s19, 1
      %p242 = scmp.lt.s32.totalorder %s239, 31
      %s243 = scalar_select %p242, %s239, 31
      %s244 = smul.addr %s241, 32
      %s245 = sadd.s32 %s243, %s244
      %s246 = smul.addr %s245, 4
      %s247 = scalar_lea.vmem %s0, %s246
      %s248 = smul.u32 8, %s20
      %p249 = scmp.lt.s32.totalorder %s19, 1
      %s250 = scalar_select %p249, %s19, 1
      %s251 = scalar_lea.vmem %s2, %s250
      %p252 = scmp.lt.s32.totalorder %s19, 1
      %s253 = scalar_select %p252, %s19, 1
      %s254 = scalar_lea.vmem %s3, %s253
      %s255 = smul.u32 8, %s20
      %p256 = scmp.lt.s32.totalorder %s19, 1
      %s257 = scalar_select %p256, %s19, 1
      %p258 = scmp.lt.s32.totalorder %s255, 31
      %s259 = scalar_select %p258, %s255, 31
      %s260 = smul.addr %s257, 32
      %s261 = sadd.s32 %s259, %s260
      %s262 = smul.addr %s261, 8
      %s263 = scalar_lea.vmem %s4, %s262
      %s264 = smul.u32 8, %s20
      %v266 = vld [vmem:[%s247] sm:$0xf]
      %v267 = vld [vmem:[%s247 + $0x4] sm:$0xf]
      %v268 = vld [vmem:[%s247 + $0x8] sm:$0xf]
      %v269 = vld [vmem:[%s247 + $0xc] sm:$0xf]
      %v270 = vld [vmem:[%s247 + $0x10] sm:$0xf]
      %v271 = vld [vmem:[%s247 + $0x14] sm:$0xf]
      %v272 = vld [vmem:[%s247 + $0x18] sm:$0xf]
      %v273 = vld [vmem:[%s247 + $0x1c] sm:$0xf]
      %v274 = vld [vmem:[%s1] sm:$0x3]
      %v283 = vunpack.c.l.b16 %v266
      %v284 = vunpack.c.l.b16 %v267
      %v285 = vunpack.c.l.b16 %v268
      %v286 = vunpack.c.l.b16 %v269
      %v287 = vunpack.c.l.b16 %v270
      %v288 = vunpack.c.l.b16 %v271
      %v289 = vunpack.c.l.b16 %v272
      %v290 = vunpack.c.l.b16 %v273
      %v291 = vpack.c.b16 %v284, %v283
      %v292 = vpack.c.b16 %v286, %v285
      %v293 = vpack.c.b16 %v288, %v287
      %v294 = vpack.c.b16 %v290, %v289
      %vm295 = vcmask 31744
      %v297 = vsel %vm295, %v291, 0
      %v300 = vsel %vm295, %v292, 0
      %v303 = vsel %vm295, %v293, 0
      %v306 = vsel %vm295, %v294, 0
      %vm308 = vcmask 1041408
      %v310 = vsel %vm308, %v274, 0
      %312 = vmatpush.bf16.msra.mxu0 0
      %313 = vmatpush.bf16.msra.mxu0 0
      %314 = vmatpush.bf16.msra.mxu0 0
      %315 = vmatpush.bf16.msra.mxu0 0
      %316 = vmatpush.bf16.msra.mxu0 0
      %317 = vmatpush.bf16.msra.mxu0 0
      %318 = vmatpush.bf16.msra.mxu0 0
      %319 = vmatpush.bf16.msra.mxu0 %v310
      %320 = vmatmul.bf16.gmra.mxu0 %v297
      %v321 = vpop.f32.mrf.mxu0
      %v322 = vadd.f32 0.0, %v321
      %v323 = vpop.f32.mrf.mxu0
      %v324 = vadd.f32 0.0, %v323
      %325 = vmatmul.bf16.gmra.mxu0 %v300
      %v326 = vpop.f32.mrf.mxu0
      %v327 = vadd.f32 0.0, %v326
      %v328 = vpop.f32.mrf.mxu0
      %v329 = vadd.f32 0.0, %v328
      %330 = vmatmul.bf16.gmra.mxu0 %v303
      %v331 = vpop.f32.mrf.mxu0
      %v332 = vadd.f32 0.0, %v331
      %v333 = vpop.f32.mrf.mxu0
      %v334 = vadd.f32 0.0, %v333
      %335 = vmatmul.bf16.gmra.mxu0 %v306
      %v336 = vpop.f32.mrf.mxu0
      %v337 = vadd.f32 0.0, %v336
      %v338 = vpop.f32.mrf.mxu0
      %v339 = vadd.f32 0.0, %v338
      %340 = vdwg.mxu0
      %v341 = vld [vmem:[%s251] sm:$0x1]
      %v343 = vperm.slane %v341, 0
      %v345 = vmul.f32 %v322, %v343
      %v346 = vmul.f32 %v324, %v343
      %v347 = vmul.f32 %v327, %v343
      %v348 = vmul.f32 %v329, %v343
      %v349 = vmul.f32 %v332, %v343
      %v350 = vmul.f32 %v334, %v343
      %v351 = vmul.f32 %v337, %v343
      %v352 = vmul.f32 %v339, %v343
      %v353 = vld [vmem:[%s254] sm:$0x1]
      %v355 = vperm.slane %v353, 0
      %v357 = vadd.f32 %v345, %v355
      %v358 = vadd.f32 %v346, %v355
      %v359 = vadd.f32 %v347, %v355
      %v360 = vadd.f32 %v348, %v355
      %v361 = vadd.f32 %v349, %v355
      %v362 = vadd.f32 %v350, %v355
      %v363 = vadd.f32 %v351, %v355
      %v364 = vadd.f32 %v352, %v355
      %v365 = vmax.f32 %v357, 0.0
      %v366 = vmax.f32 %v358, 0.0
      %v367 = vmax.f32 %v359, 0.0
      %v368 = vmax.f32 %v360, 0.0
      %v369 = vmax.f32 %v361, 0.0
      %v370 = vmax.f32 %v362, 0.0
      %v371 = vmax.f32 %v363, 0.0
      %v372 = vmax.f32 %v364, 0.0
      %vm373 = vcmask 261120
      %374 = vst.msk [vmem:[%s263] sm:$0xff] %vm373, %v365
      %375 = vst.msk [vmem:[%s263 + $0x8] sm:$0xff] %vm373, %v366
      %376 = vst.msk [vmem:[%s263 + $0x10] sm:$0xff] %vm373, %v367
      %377 = vst.msk [vmem:[%s263 + $0x18] sm:$0xff] %vm373, %v368
      %378 = vst.msk [vmem:[%s263 + $0x20] sm:$0xff] %vm373, %v369
      %379 = vst.msk [vmem:[%s263 + $0x28] sm:$0xff] %vm373, %v370
      %380 = vst.msk [vmem:[%s263 + $0x30] sm:$0xff] %vm373, %v371
      %381 = vst.msk [vmem:[%s263 + $0x38] sm:$0xff] %vm373, %v372
      %s382 = smul.u32 8, %s20
      %p383 = scmp.lt.s32.totalorder %s19, 1
      %s384 = scalar_select %p383, %s19, 1
      %p385 = scmp.lt.s32.totalorder %s382, 31
      %s386 = scalar_select %p385, %s382, 31
      %s387 = smul.addr %s384, 32
      %s388 = sadd.s32 %s386, %s387
      %s389 = smul.addr %s388, 8
      %s390 = scalar_lea.vmem %s4, %s389
      // Predicated region
      $region37: #{basic_tr_conv.3} parent=35 // pred_check
        %p391 = pneg %p148
      $region38: #{basic_tr_conv.3} parent=35 // pred_check_branch
        %393 = sbr.rel (%p391) target = $region40
      $region39: #{basic_tr_conv.3} parent=35 // pred_region
        %s394 = smul.u32 8, %s20
      $region40: #{basic_tr_conv.3} parent=35 // pred_fallthru
        _
    $region36: #{basic_tr_conv.3} parent=5 // pred_fallthru
      _
    %p395 = scmp.le.s32.totalorder 2, %s10
    // Predicated region
    $region41: #{basic_tr_conv.3} parent=5 // pred_check
      %p396 = pneg %p395
    $region42: #{basic_tr_conv.3} parent=5 // pred_check_branch
      %398 = sbr.rel (%p396) target = $region44
    $region43: #{basic_tr_conv.3} parent=5 // pred_region
      %s399 = ssub.s32 %s10, 2
      // Predicated region
      $region45: #{basic_tr_conv.3} parent=43 // pred_check
        %p400 = pneg %p154
      $region46: #{basic_tr_conv.3} parent=43 // pred_check_branch
        %402 = sbr.rel (%p400) target = $region48
      $region47: #{basic_tr_conv.3} parent=43 // pred_region
        %s403 = smul.u32 8, %s22
        %p404 = scmp.lt.s32.totalorder %s21, 1
        %s405 = scalar_select %p404, %s21, 1
        %p406 = scmp.lt.s32.totalorder %s403, 31
        %s407 = scalar_select %p406, %s403, 31
        %s408 = smul.addr %s405, 32
        %s409 = sadd.s32 %s407, %s408
        %s410 = smul.addr %s409, 8
        %s411 = scalar_lea.vmem %s4, %s410
      $region48: #{basic_tr_conv.3} parent=43 // pred_fallthru
        _
    $region44: #{basic_tr_conv.3} parent=5 // pred_fallthru
      _
  $region6: #{basic_tr_conv.3} parent=0 // loop_footer
    %s14 = sadd.s32 1, %s10
  $region7: #{basic_tr_conv.3} parent=0 // loop_footer_branch
    %9 = sbr.rel target = $region3
  $region8: #{basic_tr_conv.3} parent=0 // loop_exit
    _

// kernel: basic_tr_conv.2
$region0: #{basic_tr_conv.2}
  #allocation0 [shape = 'u32[]', space=smem, size = 0x4, offset = 0x4, fixed_abs, tag = 'smem constant byte address 0x4 - core index']
  #allocation1 [shape = 'u32[72,128]{1,0:T(1,128)}', space=vmem, size = 0x9000, scoped, tag = 'internal scratch']
  %s0 = inlined_call_operand.vmem [shape: bf16[2,256,4], index: 0, kind: input, shape index: {}]
  %s1 = inlined_call_operand.vmem [shape: f32[2,1,4], index: 1, kind: output, shape index: {0}]
  %s2 = inlined_call_operand.vmem [shape: f32[2,4,4], index: 2, kind: output, shape index: {1}]
  %3 = xla_tuple %s1, %s2
  %s4 = sld [smem:[#allocation0]]
  $region53: #{basic_tr_conv.2} parent=0
    _
  %s6 = ssub.s32 1, %s4
  %s7 = scalar_select 0, %s6, %s4
  loop: start=0, step=1, limit=10
  $region2: #{basic_tr_conv.2} parent=0 // loop_pre_header
    _
  $region3: #{basic_tr_conv.2} parent=0 // loop_header
    %s9 = sphi 0, %s13
    %p10 = scmp.ge.s32.totalorder %s9, 10
    %s16 = sphi 0, %s28
    %s17 = sphi 0, %s24
    %s18 = sphi 0, %s16
    %s19 = sphi 0, %s17
    %s20 = sphi 0, %s18
    %s21 = sphi 0, %s19
    %s33 = sphi 0, %s35
    %s36 = sphi 0, %s33
    %s37 = sphi 0, %s36
    %s53 = sphi 0, %s37
    %s59 = sphi 0, %s61
    %s62 = sphi 0, %s59
    %s63 = sphi 0, %s62
    %s79 = sphi 0, %s63
    %s85 = sphi 0, %s87
    %s88 = sphi 0, %s85
    %s89 = sphi 0, %s88
    %s105 = sphi 0, %s89
  $region4: #{basic_tr_conv.2} parent=0 // loop_header_branch
    %12 = sbr.rel (%p10) target = $region8
  $region5: #{basic_tr_conv.2} parent=0 // loop_body
    %s14 = ssub.s32 %s9, 1
    %s15 = ssub.s32 %s9, 2
    %s22 = sadd.s32 1, %s17
    %p23 = scmp.ge.s32.totalorder %s22, 4
    %s24 = scalar_select %p23, 0, %s22
    %s25 = sadd.s32 1, %s16
    %s26 = scalar_select %p23, %s25, %s16
    %p27 = scmp.ge.s32.totalorder %s26, 2
    %s28 = scalar_select %p27, 0, %s26
    %s29 = ssub.s32 %s16, %s28
    %s30 = ssub.s32 %s17, %s24
    %s31 = sor.u32 %s29, %s30
    %p32 = scmp.eq.s32.totalorder %s31, 0
    %s34 = sadd.s32 %s33, 1
    %s35 = scalar_select %p32, %s33, %s34
    %p38 = pneg %p32
    %p39 = scmp.eq.s32.totalorder %s9, 7
    %p40 = por %p38, %p39
    %p41 = scmp.ne.s32.totalorder %s33, %s36
    %p42 = scmp.eq.s32.totalorder %s9, 0
    %p43 = por %p41, %p42
    %p44 = scmp.ne.s32.totalorder %s33, %s36
    %p45 = scmp.eq.s32.totalorder %s14, 7
    %p46 = por %p44, %p45
    %p47 = scmp.ne.s32.totalorder %s36, %s37
    %p48 = scmp.eq.s32.totalorder %s14, 0
    %p49 = por %p47, %p48
    %p50 = scmp.ne.s32.totalorder %s36, %s37
    %p51 = scmp.eq.s32.totalorder %s15, 7
    %p52 = por %p50, %p51
    %p54 = scmp.ne.s32.totalorder %s37, %s53
    %p55 = scmp.eq.s32.totalorder %s15, 0
    %p56 = por %p54, %p55
    %s57 = ssub.s32 %s16, %s28
    %p58 = scmp.eq.s32.totalorder %s57, 0
    %s60 = sadd.s32 %s59, 1
    %s61 = scalar_select %p58, %s59, %s60
    %p64 = pneg %p58
    %p65 = scmp.eq.s32.totalorder %s9, 7
    %p66 = por %p64, %p65
    %p67 = scmp.ne.s32.totalorder %s59, %s62
    %p68 = scmp.eq.s32.totalorder %s9, 0
    %p69 = por %p67, %p68
    %p70 = scmp.ne.s32.totalorder %s59, %s62
    %p71 = scmp.eq.s32.totalorder %s14, 7
    %p72 = por %p70, %p71
    %p73 = scmp.ne.s32.totalorder %s62, %s63
    %p74 = scmp.eq.s32.totalorder %s14, 0
    %p75 = por %p73, %p74
    %p76 = scmp.ne.s32.totalorder %s62, %s63
    %p77 = scmp.eq.s32.totalorder %s15, 7
    %p78 = por %p76, %p77
    %p80 = scmp.ne.s32.totalorder %s63, %s79
    %p81 = scmp.eq.s32.totalorder %s15, 0
    %p82 = por %p80, %p81
    %s83 = ssub.s32 %s16, %s28
    %p84 = scmp.eq.s32.totalorder %s83, 0
    %s86 = sadd.s32 %s85, 1
    %s87 = scalar_select %p84, %s85, %s86
    %p90 = pneg %p84
    %p91 = scmp.eq.s32.totalorder %s9, 7
    %p92 = por %p90, %p91
    %p93 = scmp.ne.s32.totalorder %s85, %s88
    %p94 = scmp.eq.s32.totalorder %s9, 0
    %p95 = por %p93, %p94
    %p96 = scmp.ne.s32.totalorder %s85, %s88
    %p97 = scmp.eq.s32.totalorder %s14, 7
    %p98 = por %p96, %p97
    %p99 = scmp.ne.s32.totalorder %s88, %s89
    %p100 = scmp.eq.s32.totalorder %s14, 0
    %p101 = por %p99, %p100
    %p102 = scmp.ne.s32.totalorder %s88, %s89
    %p103 = scmp.eq.s32.totalorder %s15, 7
    %p104 = por %p102, %p103
    %p106 = scmp.ne.s32.totalorder %s89, %s105
    %p107 = scmp.eq.s32.totalorder %s15, 0
    %p108 = por %p106, %p107
    %p109 = scmp.le.s32.totalorder 1, %s9
    %p110 = scmp.lt.s32.totalorder %s9, 9
    %p111 = pnand %p109, %p110
    %p112 = pneg %p111
    // Predicated region
    $region9: #{basic_tr_conv.2} parent=5 // pred_check
      _
    $region10: #{basic_tr_conv.2} parent=5 // pred_check_branch
      %114 = sbr.rel (%p111) target = $region12
    $region11: #{basic_tr_conv.2} parent=5 // pred_region
      %s115 = ssub.s32 %s9, 1
    $region12: #{basic_tr_conv.2} parent=5 // pred_fallthru
      _
    %p116 = scmp.lt.s32.totalorder %s9, 8
    // Predicated region
    $region13: #{basic_tr_conv.2} parent=5 // pred_check
      %p117 = pneg %p116
    $region14: #{basic_tr_conv.2} parent=5 // pred_check_branch
      %119 = sbr.rel (%p117) target = $region16
    $region15: #{basic_tr_conv.2} parent=5 // pred_region
      // Predicated region
      $region17: #{basic_tr_conv.2} parent=15 // pred_check
        %p120 = pneg %p43
      $region18: #{basic_tr_conv.2} parent=15 // pred_check_branch
        %122 = sbr.rel (%p120) target = $region20
      $region19: #{basic_tr_conv.2} parent=15 // pred_region
        %s123 = smul.u32 8, %s17
        %p124 = scmp.lt.s32.totalorder %s16, 1
        %s125 = scalar_select %p124, %s16, 1
        %p126 = scmp.lt.s32.totalorder %s123, 31
        %s127 = scalar_select %p126, %s123, 31
        %s128 = smul.addr %s125, 32
        %s129 = sadd.s32 %s127, %s128
        %s130 = smul.addr %s129, 4
        %s131 = scalar_lea.vmem %s0, %s130
        %s132 = smul.u32 8, %s17
      $region20: #{basic_tr_conv.2} parent=15 // pred_fallthru
        _
    $region16: #{basic_tr_conv.2} parent=5 // pred_fallthru
      _
    %p133 = scmp.le.s32.totalorder 1, %s9
    %p134 = scmp.lt.s32.totalorder %s9, 9
    %p135 = pnand %p133, %p134
    %p136 = pneg %p135
    // Predicated region
    $region21: #{basic_tr_conv.2} parent=5 // pred_check
      _
    $region22: #{basic_tr_conv.2} parent=5 // pred_check_branch
      %138 = sbr.rel (%p135) target = $region24
    $region23: #{basic_tr_conv.2} parent=5 // pred_region
      %s139 = ssub.s32 %s9, 1
      %s140 = smul.u32 8, %s19
      %p141 = scmp.lt.s32.totalorder %s18, 1
      %s142 = scalar_select %p141, %s18, 1
      %p143 = scmp.lt.s32.totalorder %s140, 31
      %s144 = scalar_select %p143, %s140, 31
      %s145 = smul.addr %s142, 32
      %s146 = sadd.s32 %s144, %s145
      %s147 = smul.addr %s146, 4
      %s148 = scalar_lea.vmem %s0, %s147
      %p149 = pneg %p49
      %p150 = pneg %p46
      %p151 = pneg %p75
      %p152 = pneg %p72
      %p153 = scmp.lt.s32.totalorder %s18, 1
      %s154 = scalar_select %p153, %s18, 1
      %s155 = scalar_lea.vmem %s1, %s154
      %p156 = pneg %p101
      %p157 = pneg %p98
      %p158 = scmp.lt.s32.totalorder %s18, 1
      %s159 = scalar_select %p158, %s18, 1
      %s160 = smul.addr %s159, 4
      %s161 = scalar_lea.vmem %s2, %s160
      %s162 = smul.u32 8, %s19
      %p163 = scmp.lt.s32.totalorder %s18, 1
      %s164 = scalar_select %p163, %s18, 1
      %p165 = scmp.lt.s32.totalorder %s162, 31
      %s166 = scalar_select %p165, %s162, 31
      %s167 = smul.addr %s164, 32
      %s168 = sadd.s32 %s166, %s167
      %s169 = smul.addr %s168, 4
      %s170 = scalar_lea.vmem %s0, %s169
      %s171 = smul.u32 8, %s19
      %p172 = scmp.lt.s32.totalorder %s18, 1
      %s173 = scalar_select %p172, %s18, 1
      %s174 = scalar_lea.vmem %s1, %s173
      %p175 = scmp.lt.s32.totalorder %s18, 1
      %s176 = scalar_select %p175, %s18, 1
      %s177 = smul.addr %s176, 4
      %s178 = scalar_lea.vmem %s2, %s177
      %v180 = vld [vmem:[%s170] sm:$0xf]
      %v181 = vld [vmem:[%s170 + $0x4] sm:$0xf]
      %v182 = vld [vmem:[%s170 + $0x8] sm:$0xf]
      %v183 = vld [vmem:[%s170 + $0xc] sm:$0xf]
      %v184 = vld [vmem:[%s170 + $0x10] sm:$0xf]
      %v185 = vld [vmem:[%s170 + $0x14] sm:$0xf]
      %v186 = vld [vmem:[%s170 + $0x18] sm:$0xf]
      %v187 = vld [vmem:[%s170 + $0x1c] sm:$0xf]
      %v196 = vunpack.c.l.b16 %v180
      %v197 = vunpack.c.l.b16 %v181
      %v198 = vunpack.c.l.b16 %v182
      %v199 = vunpack.c.l.b16 %v183
      %v200 = vunpack.c.l.b16 %v184
      %v201 = vunpack.c.l.b16 %v185
      %v202 = vunpack.c.l.b16 %v186
      %v203 = vunpack.c.l.b16 %v187
      %v204 = vpack.c.b16 %v197, %v196
      %v205 = vpack.c.b16 %v199, %v198
      %v206 = vpack.c.b16 %v201, %v200
      %v207 = vpack.c.b16 %v203, %v202
      %212 = vxpose.xlu0.c.b16.start [1/8] %v204, 128
      %213 = vxpose.xlu0.c.b16.cont [2/8] %v205, 128
      %214 = vxpose.xlu0.c.b16.cont [3/8] %v206, 128
      %215 = vxpose.xlu0.c.b16.cont [4/8] %v207, 128
      %216 = vxpose.xlu0.c.b16.cont [5/8] 0, 128
      %217 = vxpose.xlu0.c.b16.cont [6/8] 0, 128
      %218 = vxpose.xlu0.c.b16.cont [7/8] 0, 128
      %219 = vxpose.xlu0.c.b16.end [8/8] 0, 128
      %v220 = vpop.trf.xlu0
      %v221 = vpop.trf.xlu0
      %v222 = vpop.trf.xlu0
      %v223 = vpop.trf.xlu0
      %v224 = vpop.trf.xlu0
      %v225 = vpop.trf.xlu0
      %v226 = vpop.trf.xlu0
      %v227 = vpop.trf.xlu0
      %vm228 = vcmask 523264
      %v230 = vsel %vm228, %v220, 0
      %232 = vmatpush.bf16.msra.mxu0 0
      %233 = vmatpush.bf16.msra.mxu0 0
      %234 = vmatpush.bf16.msra.mxu0 0
      %235 = vmatpush.bf16.msra.mxu0 0
      %236 = vmatpush.bf16.msra.mxu0 %v207
      %237 = vmatpush.bf16.msra.mxu0 %v206
      %238 = vmatpush.bf16.msra.mxu0 %v205
      %239 = vmatpush.bf16.msra.mxu0 %v204
      %240 = vmatmul.bf16.gmra.mxu0 %v230
      %v241 = vpop.f32.mrf.mxu0
      %v242 = vadd.f32 0.0, %v241
      %v243 = vpop.f32.mrf.mxu0
      %244 = vdwg.mxu0
      %v245 = vunpack.c.l.bf16 %v180
      %v246 = vunpack.c.l.bf16 %v181
      %v247 = vunpack.c.l.bf16 %v182
      %v248 = vunpack.c.l.bf16 %v183
      %v249 = vunpack.c.l.bf16 %v184
      %v250 = vunpack.c.l.bf16 %v185
      %v251 = vunpack.c.l.bf16 %v186
      %v252 = vunpack.c.l.bf16 %v187
      %vm253 = vcmask 31744
      %v254 = vsel %vm253, %v245, 0.0
      %v255 = vsel %vm253, %v246, 0.0
      %v256 = vadd.f32 %v254, %v255
      %v257 = vsel %vm253, %v247, 0.0
      %v258 = vadd.f32 %v256, %v257
      %v259 = vsel %vm253, %v248, 0.0
      %v260 = vadd.f32 %v258, %v259
      %v261 = vsel %vm253, %v249, 0.0
      %v262 = vadd.f32 %v260, %v261
      %v263 = vsel %vm253, %v250, 0.0
      %v264 = vadd.f32 %v262, %v263
      %v265 = vsel %vm253, %v251, 0.0
      %v266 = vadd.f32 %v264, %v265
      %v267 = vsel %vm253, %v252, 0.0
      %v268 = vadd.f32 %v266, %v267
      %v269 = vrot.slane %v268, 4
      %v270 = vadd.f32 %v268, %v269
      %v271 = vrot.slane %v270, 2
      %v272 = vadd.f32 %v270, %v271
      %v273 = vrot.slane %v272, 1
      %v274 = vadd.f32 %v272, %v273
      %p275 = scmp.eq.s32.totalorder %s19, 0
      // Predicated region
      $region25: #{basic_tr_conv.2} parent=23 // pred_check
        %p276 = pneg %p275
      $region26: #{basic_tr_conv.2} parent=23 // pred_check_branch
        %278 = sbr.rel (%p276) target = $region28
      $region27: #{basic_tr_conv.2} parent=23 // pred_region
        %vm279 = vcmask 24576
        %280 = vst.msk [vmem:[%s174] sm:$0x1] %vm279, %v274
        %vm281 = vcmask 27648
        %282 = vst.msk [vmem:[%s178] sm:$0xf] %vm281, %v242
      $region28: #{basic_tr_conv.2} parent=23 // pred_fallthru
        _
      %p283 = scmp.ne.s32.totalorder %s19, 0
      // Predicated region
      $region29: #{basic_tr_conv.2} parent=23 // pred_check
        %p284 = pneg %p283
      $region30: #{basic_tr_conv.2} parent=23 // pred_check_branch
        %286 = sbr.rel (%p284) target = $region32
      $region31: #{basic_tr_conv.2} parent=23 // pred_region
        %v287 = vld [vmem:[%s174] sm:$0x1]
        %v288 = vadd.f32 %v287, %v274
        %vm289 = vcmask 24576
        %290 = vst.msk [vmem:[%s174] sm:$0x1] %vm289, %v288
        %v291 = vld [vmem:[%s178] sm:$0xf]
        %v292 = vadd.f32 %v291, %v242
        %vm293 = vcmask 27648
        %294 = vst.msk [vmem:[%s178] sm:$0xf] %vm293, %v292
      $region32: #{basic_tr_conv.2} parent=23 // pred_fallthru
        _
      %p295 = scmp.lt.s32.totalorder %s18, 1
      %s296 = scalar_select %p295, %s18, 1
      %s297 = scalar_lea.vmem %s1, %s296
      %p298 = scmp.lt.s32.totalorder %s18, 1
      %s299 = scalar_select %p298, %s18, 1
      %s300 = smul.addr %s299, 4
      %s301 = scalar_lea.vmem %s2, %s300
      // Predicated region
      $region33: #{basic_tr_conv.2} parent=23 // pred_check
        %p302 = pneg %p72
      $region34: #{basic_tr_conv.2} parent=23 // pred_check_branch
        %304 = sbr.rel (%p302) target = $region36
      $region35: #{basic_tr_conv.2} parent=23 // pred_region
        _
      $region36: #{basic_tr_conv.2} parent=23 // pred_fallthru
        _
      // Predicated region
      $region37: #{basic_tr_conv.2} parent=23 // pred_check
        %p305 = pneg %p98
      $region38: #{basic_tr_conv.2} parent=23 // pred_check_branch
        %307 = sbr.rel (%p305) target = $region40
      $region39: #{basic_tr_conv.2} parent=23 // pred_region
        _
      $region40: #{basic_tr_conv.2} parent=23 // pred_fallthru
        _
    $region24: #{basic_tr_conv.2} parent=5 // pred_fallthru
      _
    %p308 = scmp.le.s32.totalorder 2, %s9
    // Predicated region
    $region41: #{basic_tr_conv.2} parent=5 // pred_check
      %p309 = pneg %p308
    $region42: #{basic_tr_conv.2} parent=5 // pred_check_branch
      %311 = sbr.rel (%p309) target = $region44
    $region43: #{basic_tr_conv.2} parent=5 // pred_region
      %s312 = ssub.s32 %s9, 2
      // Predicated region
      $region45: #{basic_tr_conv.2} parent=43 // pred_check
        %p313 = pneg %p78
      $region46: #{basic_tr_conv.2} parent=43 // pred_check_branch
        %315 = sbr.rel (%p313) target = $region48
      $region47: #{basic_tr_conv.2} parent=43 // pred_region
        %p316 = scmp.lt.s32.totalorder %s20, 1
        %s317 = scalar_select %p316, %s20, 1
        %s318 = scalar_lea.vmem %s1, %s317
      $region48: #{basic_tr_conv.2} parent=43 // pred_fallthru
        _
      // Predicated region
      $region49: #{basic_tr_conv.2} parent=43 // pred_check
        %p319 = pneg %p104
      $region50: #{basic_tr_conv.2} parent=43 // pred_check_branch
        %321 = sbr.rel (%p319) target = $region52
      $region51: #{basic_tr_conv.2} parent=43 // pred_region
        %p322 = scmp.lt.s32.totalorder %s20, 1
        %s323 = scalar_select %p322, %s20, 1
        %s324 = smul.addr %s323, 4
        %s325 = scalar_lea.vmem %s2, %s324
      $region52: #{basic_tr_conv.2} parent=43 // pred_fallthru
        _
    $region44: #{basic_tr_conv.2} parent=5 // pred_fallthru
      _
  $region6: #{basic_tr_conv.2} parent=0 // loop_footer
    %s13 = sadd.s32 1, %s9
  $region7: #{basic_tr_conv.2} parent=0 // loop_footer_branch
    %8 = sbr.rel target = $region3
  $region8: #{basic_tr_conv.2} parent=0 // loop_exit
    _

</llo_original>
